<compile_context>
chip_gen: v7x
topology: tpu7x:2x2x1
jax: 0.10.0
libtpu: 0.0.40
codegen_flags: <defaults>
</compile_context>

<pallas_src>
import functools

import jax
import jax.numpy as jnp
from jax import lax
from jax.experimental import pallas as pl
from jax.experimental.pallas import tpu as pltpu

_LANES = 128
_SUBLANES = 8


def _ceil_div(a, b):
    return -(-a // b)


def _sublane_multiple(dtype):
    itemsize = jnp.dtype(dtype).itemsize
    if itemsize >= 4:
        return _SUBLANES
    return _SUBLANES * (4 // itemsize)   # bf16 -> 16, int8/fp8 -> 32


def _default_num_cores():
    # v7x has 2 TensorCores per chip; shard the reduction across them there.
    try:
        kind = jax.devices()[0].device_kind.lower()
    except Exception:
        return 1
    return 2 if "v7" in kind else 1


def _wbce_kernel(x_ref, t_ref, o_ref, *, w0, w1, rows, tile_rows, chunk_rows,
                 steps, binary_targets):
    c = pl.program_id(0)          # per-core ("parallel") axis
    i = pl.program_id(1)          # reduction ("arbitrary") axis

    @pl.when(i == 0)
    def _():
        o_ref[...] = jnp.zeros_like(o_ref)

    # Logical (unclamped) block index; the DMA index_map clamps separately.
    block_idx = c * steps + i
    # Row-granular validity bound: stays well inside int32 even for huge
    # inputs because everything is counted in 128-element rows, not elements.
    valid_rows = rows - block_idx * tile_rows     # <= 0 for dummy blocks
    n_chunks = tile_rows // chunk_rows

    def chunk_sum(r0, acc, masked):
        x = x_ref[pl.ds(r0, chunk_rows), :].astype(jnp.float32)
        t = t_ref[pl.ds(r0, chunk_rows), :].astype(jnp.float32)
        if binary_targets:
            # One log/element (exact for t in {0,1}).
            q = t * x + (1.0 - t) * (1.0 - x)
            w = w0 + t * (w1 - w0)
            weighted = -w * jnp.maximum(jnp.log(q), -100.0)
        else:
            # General (soft-target) path: matches PyTorch BCELoss exactly.
            log_p = jnp.maximum(jnp.log(x), -100.0)
            log_1mp = jnp.maximum(jnp.log(1.0 - x), -100.0)
            loss = -(t * log_p + (1.0 - t) * log_1mp)
            weighted = loss * (t * w1 + (1.0 - t) * w0)
        if masked:
            row = lax.broadcasted_iota(jnp.int32, (chunk_rows, _LANES), 0)
            weighted = jnp.where(r0 + row < valid_rows, weighted, 0.0)
        partial = weighted.reshape(chunk_rows // _SUBLANES, _SUBLANES,
                                   _LANES).sum(axis=0)
        return acc + partial

    def block_sum(masked):
        zero = jnp.zeros((_SUBLANES, _LANES), jnp.float32)
        if n_chunks == 1:
            return chunk_sum(0, zero, masked)
        return lax.fori_loop(
            0, n_chunks,
            lambda ci, acc: chunk_sum(
                pl.multiple_of(ci * chunk_rows, chunk_rows), acc, masked),
            zero, unroll=True)

    is_full = valid_rows >= tile_rows

    @pl.when(is_full)                    # fast path: no mask work
    def _():
        o_ref[...] += block_sum(masked=False)[None, :, :]

    @pl.when(jnp.logical_not(is_full))   # only the last / dummy block
    def _():
        o_ref[...] += block_sum(masked=True)[None, :, :]


def weighted_bce_loss(inputs, targets, weight_0=1.0, weight_1=1.0, *,
                      max_tile_rows=4096, num_cores=None,
                      assume_binary_targets=True):
    assert inputs.shape == targets.shape
    n = int(inputs.size)
    assert n > 0

    if num_cores is None:
        num_cores = _default_num_cores()

    x = inputs.reshape(-1)
    t = targets.reshape(-1)

    rows = n // _LANES
    rem = n - rows * _LANES
    n_main = rows * _LANES

    total = jnp.zeros((), jnp.float32)

    if rows > 0:
        sub = max(_sublane_multiple(x.dtype), _sublane_multiple(t.dtype))
        tile_rows = min(int(max_tile_rows), _ceil_div(rows, sub) * sub)
        chunk_rows = 512
        if tile_rows <= chunk_rows:
            chunk_rows = tile_rows                       # single chunk
        else:
            tile_rows = (tile_rows // chunk_rows) * chunk_rows
        total_blocks = _ceil_div(rows, tile_rows)
        steps = _ceil_div(total_blocks, num_cores)       # grid steps per core

        # n % 128 == 0 (common case): reshape is a free bitcast, zero copies.
        # Otherwise only a prefix slice feeds the kernel; the <128-element
        # tail is handled by the jnp epilogue below.
        if rem:
            x2 = x[:n_main].reshape(rows, _LANES)
            t2 = t[:n_main].reshape(rows, _LANES)
        else:
            x2 = x.reshape(rows, _LANES)
            t2 = t.reshape(rows, _LANES)

        kernel = functools.partial(
            _wbce_kernel, w0=float(weight_0), w1=float(weight_1), rows=rows,
            tile_rows=tile_rows, chunk_rows=chunk_rows, steps=steps,
            binary_targets=bool(assume_binary_targets))

        def in_map(c, i):
            # Clamp so dummy trailing blocks never index past the array; their
            # contribution is zeroed by the in-kernel row mask.
            return (jnp.minimum(c * steps + i, total_blocks - 1), 0)

        bytes_accessed = (x2.size * x2.dtype.itemsize
                          + t2.size * t2.dtype.itemsize
                          + num_cores * _SUBLANES * _LANES * 4)
        cost = pl.CostEstimate(
            flops=10 * n_main,
            transcendentals=(n_main if assume_binary_targets else 2 * n_main),
            bytes_accessed=bytes_accessed)

        partials = pl.pallas_call(
            kernel,
            out_shape=jax.ShapeDtypeStruct((num_cores, _SUBLANES, _LANES),
                                           jnp.float32),
            grid_spec=pltpu.PrefetchScalarGridSpec(
                num_scalar_prefetch=0,
                grid=(num_cores, steps),
                in_specs=[
                    pl.BlockSpec((tile_rows, _LANES), in_map),
                    pl.BlockSpec((tile_rows, _LANES), in_map),
                ],
                out_specs=pl.BlockSpec((1, _SUBLANES, _LANES),
                                       lambda c, i: (c, 0, 0)),
            ),
            compiler_params=pltpu.CompilerParams(
                dimension_semantics=("parallel", "arbitrary"),
                vmem_limit_bytes=32 * 1024 * 1024),
            cost_estimate=cost,
        )(x2, t2)

        total = total + jnp.sum(partials)

    if rem:
        # Tiny (<128-element) unaligned tail: plain jnp epilogue (exact
        # PyTorch formula, works for soft targets too).
        xr = x[n_main:].astype(jnp.float32)
        tr = t[n_main:].astype(jnp.float32)
        loss = -(tr * jnp.maximum(jnp.log(xr), -100.0)
                 + (1.0 - tr) * jnp.maximum(jnp.log(1.0 - xr), -100.0))
        w = tr * float(weight_1) + (1.0 - tr) * float(weight_0)
        total = total + jnp.sum(loss * w)

    # Trivial epilogue: mean over all elements.
    return total / jnp.float32(n)


def _reference(inputs, targets, weight_0=1.0, weight_1=1.0):
    x = inputs.astype(jnp.float32)
    t = targets.astype(jnp.float32)
    loss = -(t * jnp.maximum(jnp.log(x), -100.0)
             + (1.0 - t) * jnp.maximum(jnp.log(1.0 - x), -100.0))
    w = t * weight_1 + (1.0 - t) * weight_0
    return jnp.mean(loss * w)


def _make_inputs(key, shape):
    k1, k2 = jax.random.split(key)
    logits = jax.random.normal(k1, shape, dtype=jnp.float32)
    inputs = jax.nn.sigmoid(logits)               # probabilities in (0, 1)
    targets = jax.random.bernoulli(k2, p=0.3, shape=shape).astype(jnp.float32)
    return inputs, targets


if __name__ == "__main__":
    key = jax.random.PRNGKey(0)
    weight_0, weight_1 = 1.0, 2.5

    # 1) Primary small shape from the module (lane-aligned, single block).
    k, key = jax.random.split(key)
    inputs, targets = _make_inputs(k, (2, 4, 16, 16))
    out = jax.block_until_ready(
        weighted_bce_loss(inputs, targets, weight_0, weight_1))
    ref = _reference(inputs, targets, weight_0, weight_1)
    assert jnp.allclose(out, ref, rtol=1e-5, atol=1e-5), (out, ref)

    # 2) Ragged last block + dummy core block (masked in-kernel path).
    k, key = jax.random.split(key)
    inputs2, targets2 = _make_inputs(k, (2, 4, 16, 20))
    out2 = jax.block_until_ready(
        weighted_bce_loss(inputs2, targets2, weight_0, weight_1,
                          max_tile_rows=8, num_cores=2))
    ref2 = _reference(inputs2, targets2, weight_0, weight_1)
    assert jnp.allclose(out2, ref2, rtol=1e-5, atol=1e-5), (out2, ref2)

    # 3) Sub-128-element input (pure jnp epilogue, no kernel launch).
    k, key = jax.random.split(key)
    inputs3, targets3 = _make_inputs(k, (3, 5, 7))
    out3 = jax.block_until_ready(
        weighted_bce_loss(inputs3, targets3, weight_0, weight_1))
    ref3 = _reference(inputs3, targets3, weight_0, weight_1)
    assert jnp.allclose(out3, ref3, rtol=1e-5, atol=1e-5), (out3, ref3)

    # 4) Larger input exercising the chunked inner fori_loop path.
    k, key = jax.random.split(key)
    inputs4, targets4 = _make_inputs(k, (8, 16, 32, 32))
    out4 = jax.block_until_ready(
        weighted_bce_loss(inputs4, targets4, weight_0, weight_1))
    ref4 = _reference(inputs4, targets4, weight_0, weight_1)
    assert jnp.allclose(out4, ref4, rtol=1e-5, atol=1e-5), (out4, ref4)

    print("KERNEL_OK")
</pallas_src>

<mosaic_0001>
module attributes {stable_mosaic.version = 11 : i64} {
  func.func @_wbce_kernel(%arg0: i32, %arg1: i32, %arg2: memref<16x128xf32, #tpu.memory_space<vmem>>, %arg3: memref<16x128xf32, #tpu.memory_space<vmem>>, %arg4: memref<1x8x128xf32, #tpu.memory_space<vmem>>) attributes {dimension_semantics = [#tpu.dimension_semantics<parallel>, #tpu.dimension_semantics<arbitrary>], iteration_bounds = array<i64: 1, 1>, scalar_prefetch = 0 : i64, scratch_operands = 0 : i64, tpu.core_type = #tpu.core_type<tc>, window_params = [{transform_indices = @transform_0, window_bounds = array<i64: 16, 128>}, {transform_indices = @transform_1, window_bounds = array<i64: 16, 128>}, {transform_indices = @transform_2, window_bounds = array<i64: 1, 8, 128>}]} {
    %c0_i32 = arith.constant 0 : i32
    %0 = arith.cmpi eq, %arg1, %c0_i32 : i32
    %1 = arith.extui %0 : i1 to i32
    %c0_i32_0 = arith.constant 0 : i32
    %2 = arith.cmpi ne, %1, %c0_i32_0 : i32
    scf.if %2 {
      %cst = arith.constant 0.000000e+00 : f32
      %13 = vector.broadcast %cst : f32 to vector<1x8x128xf32>
      %c0 = arith.constant 0 : index
      %c0_5 = arith.constant 0 : index
      %c0_6 = arith.constant 0 : index
      %14 = vector.load %arg4[%c0, %c0_5, %c0_6] : memref<1x8x128xf32, #tpu.memory_space<vmem>>, vector<1x8x128xf32>
      tpu.vector_store %arg4[%c0, %c0_5, %c0_6], %13 {strides = array<i32>} : memref<1x8x128xf32, #tpu.memory_space<vmem>>, vector<1x8x128xf32>,
    } else {
    }
    %c1_i32 = arith.constant 1 : i32
    %3 = arith.muli %arg0, %c1_i32 : i32
    %4 = arith.addi %3, %arg1 : i32
    %c16_i32 = arith.constant 16 : i32
    %5 = arith.muli %4, %c16_i32 : i32
    %c16_i32_1 = arith.constant 16 : i32
    %6 = arith.subi %c16_i32_1, %5 : i32
    %c16_i32_2 = arith.constant 16 : i32
    %7 = arith.cmpi sge, %6, %c16_i32_2 : i32
    %8 = arith.extui %7 : i1 to i32
    %c0_i32_3 = arith.constant 0 : i32
    %9 = arith.cmpi ne, %8, %c0_i32_3 : i32
    scf.if %9 {
      %c0 = arith.constant 0 : index
      %c0_5 = arith.constant 0 : index
      %c0_6 = arith.constant 0 : index
      %13 = vector.load %arg4[%c0, %c0_5, %c0_6] : memref<1x8x128xf32, #tpu.memory_space<vmem>>, vector<1x8x128xf32>
      %cst = arith.constant 0.000000e+00 : f32
      %14 = vector.broadcast %cst : f32 to vector<8x128xf32>
      %c0_7 = arith.constant 0 : index
      %c0_8 = arith.constant 0 : index
      %15 = vector.load %arg2[%c0_7, %c0_8] : memref<16x128xf32, #tpu.memory_space<vmem>>, vector<16x128xf32>
      %c0_9 = arith.constant 0 : index
      %c0_10 = arith.constant 0 : index
      %16 = vector.load %arg3[%c0_9, %c0_10] : memref<16x128xf32, #tpu.memory_space<vmem>>, vector<16x128xf32>
      %17 = arith.mulf %16, %15 : vector<16x128xf32>
      %cst_11 = arith.constant 1.000000e+00 : f32
      %18 = vector.broadcast %cst_11 : f32 to vector<16x128xf32>
      %19 = arith.subf %18, %16 : vector<16x128xf32>
      %cst_12 = arith.constant 1.000000e+00 : f32
      %20 = vector.broadcast %cst_12 : f32 to vector<16x128xf32>
      %21 = arith.subf %20, %15 : vector<16x128xf32>
      %22 = arith.mulf %19, %21 : vector<16x128xf32>
      %23 = arith.addf %17, %22 : vector<16x128xf32>
      %cst_13 = arith.constant 1.500000e+00 : f32
      %24 = vector.broadcast %cst_13 : f32 to vector<16x128xf32>
      %25 = arith.mulf %16, %24 : vector<16x128xf32>
      %cst_14 = arith.constant 1.000000e+00 : f32
      %26 = vector.broadcast %cst_14 : f32 to vector<16x128xf32>
      %27 = arith.addf %26, %25 : vector<16x128xf32>
      %cst_15 = arith.constant 0.000000e+00 : f32
      %28 = vector.broadcast %cst_15 : f32 to vector<16x128xf32>
      %29 = arith.subf %28, %27 : vector<16x128xf32>
      %30 = math.log %23 : vector<16x128xf32>
      %cst_16 = arith.constant -1.000000e+02 : f32
      %31 = vector.broadcast %cst_16 : f32 to vector<16x128xf32>
      %32 = arith.maximumf %30, %31 : vector<16x128xf32>
      %33 = arith.mulf %29, %32 : vector<16x128xf32>
      %34 = vector.shape_cast %33 : vector<16x128xf32> to vector<2x8x128xf32>
      %cst_17 = arith.constant dense<0.000000e+00> : vector<8x128xf32>
      %35 = vector.multi_reduction <add>, %34, %cst_17 [0] : vector<2x8x128xf32> to vector<8x128xf32>
      %36 = arith.addf %14, %35 : vector<8x128xf32>
      %37 = vector.shape_cast %36 : vector<8x128xf32> to vector<1x8x128xf32>
      %38 = arith.addf %13, %37 : vector<1x8x128xf32>
      %c0_18 = arith.constant 0 : index
      %c0_19 = arith.constant 0 : index
      %c0_20 = arith.constant 0 : index
      %39 = vector.load %arg4[%c0_18, %c0_19, %c0_20] : memref<1x8x128xf32, #tpu.memory_space<vmem>>, vector<1x8x128xf32>
      tpu.vector_store %arg4[%c0_18, %c0_19, %c0_20], %38 {strides = array<i32>} : memref<1x8x128xf32, #tpu.memory_space<vmem>>, vector<1x8x128xf32>,
    } else {
    }
    %true = arith.constant true
    %10 = arith.xori %7, %true : i1
    %11 = arith.extui %10 : i1 to i32
    %c0_i32_4 = arith.constant 0 : i32
    %12 = arith.cmpi ne, %11, %c0_i32_4 : i32
    scf.if %12 {
      %c0 = arith.constant 0 : index
      %c0_5 = arith.constant 0 : index
      %c0_6 = arith.constant 0 : index
      %13 = vector.load %arg4[%c0, %c0_5, %c0_6] : memref<1x8x128xf32, #tpu.memory_space<vmem>>, vector<1x8x128xf32>
      %cst = arith.constant 0.000000e+00 : f32
      %14 = vector.broadcast %cst : f32 to vector<8x128xf32>
      %c0_7 = arith.constant 0 : index
      %c0_8 = arith.constant 0 : index
      %15 = vector.load %arg2[%c0_7, %c0_8] : memref<16x128xf32, #tpu.memory_space<vmem>>, vector<16x128xf32>
      %c0_9 = arith.constant 0 : index
      %c0_10 = arith.constant 0 : index
      %16 = vector.load %arg3[%c0_9, %c0_10] : memref<16x128xf32, #tpu.memory_space<vmem>>, vector<16x128xf32>
      %17 = arith.mulf %16, %15 : vector<16x128xf32>
      %cst_11 = arith.constant 1.000000e+00 : f32
      %18 = vector.broadcast %cst_11 : f32 to vector<16x128xf32>
      %19 = arith.subf %18, %16 : vector<16x128xf32>
      %cst_12 = arith.constant 1.000000e+00 : f32
      %20 = vector.broadcast %cst_12 : f32 to vector<16x128xf32>
      %21 = arith.subf %20, %15 : vector<16x128xf32>
      %22 = arith.mulf %19, %21 : vector<16x128xf32>
      %23 = arith.addf %17, %22 : vector<16x128xf32>
      %cst_13 = arith.constant 1.500000e+00 : f32
      %24 = vector.broadcast %cst_13 : f32 to vector<16x128xf32>
      %25 = arith.mulf %16, %24 : vector<16x128xf32>
      %cst_14 = arith.constant 1.000000e+00 : f32
      %26 = vector.broadcast %cst_14 : f32 to vector<16x128xf32>
      %27 = arith.addf %26, %25 : vector<16x128xf32>
      %cst_15 = arith.constant 0.000000e+00 : f32
      %28 = vector.broadcast %cst_15 : f32 to vector<16x128xf32>
      %29 = arith.subf %28, %27 : vector<16x128xf32>
      %30 = math.log %23 : vector<16x128xf32>
      %cst_16 = arith.constant -1.000000e+02 : f32
      %31 = vector.broadcast %cst_16 : f32 to vector<16x128xf32>
      %32 = arith.maximumf %30, %31 : vector<16x128xf32>
      %33 = arith.mulf %29, %32 : vector<16x128xf32>
      %34 = tpu.iota {dimensions = array<i32: 0>} : vector<16x128xi32>
      %c0_i32_17 = arith.constant 0 : i32
      %35 = vector.broadcast %c0_i32_17 : i32 to vector<16x128xi32>
      %36 = arith.addi %35, %34 : vector<16x128xi32>
      %37 = vector.broadcast %6 : i32 to vector<16x128xi32>
      %38 = arith.cmpi slt, %36, %37 : vector<16x128xi32>
      %cst_18 = arith.constant 0.000000e+00 : f32
      %39 = vector.broadcast %cst_18 : f32 to vector<16x128xf32>
      %40 = arith.select %38, %33, %39 : vector<16x128xi1>, vector<16x128xf32>
      %41 = vector.shape_cast %40 : vector<16x128xf32> to vector<2x8x128xf32>
      %cst_19 = arith.constant dense<0.000000e+00> : vector<8x128xf32>
      %42 = vector.multi_reduction <add>, %41, %cst_19 [0] : vector<2x8x128xf32> to vector<8x128xf32>
      %43 = arith.addf %14, %42 : vector<8x128xf32>
      %44 = vector.shape_cast %43 : vector<8x128xf32> to vector<1x8x128xf32>
      %45 = arith.addf %13, %44 : vector<1x8x128xf32>
      %c0_20 = arith.constant 0 : index
      %c0_21 = arith.constant 0 : index
      %c0_22 = arith.constant 0 : index
      %46 = vector.load %arg4[%c0_20, %c0_21, %c0_22] : memref<1x8x128xf32, #tpu.memory_space<vmem>>, vector<1x8x128xf32>
      tpu.vector_store %arg4[%c0_20, %c0_21, %c0_22], %45 {strides = array<i32>} : memref<1x8x128xf32, #tpu.memory_space<vmem>>, vector<1x8x128xf32>,
    } else {
    }
    return
  }
  func.func @transform_0(%arg0: i32, %arg1: i32) -> (i32, i32) {
    %c1_i32 = arith.constant 1 : i32
    %0 = arith.muli %arg0, %c1_i32 : i32
    %1 = arith.addi %0, %arg1 : i32
    %c0_i32 = arith.constant 0 : i32
    %2 = arith.minsi %1, %c0_i32 : i32
    %c0_i32_0 = arith.constant 0 : i32
    %c0_i32_1 = arith.constant 0 : i32
    return %2, %c0_i32_0 : i32, i32
  }
  func.func @transform_1(%arg0: i32, %arg1: i32) -> (i32, i32) {
    %c1_i32 = arith.constant 1 : i32
    %0 = arith.muli %arg0, %c1_i32 : i32
    %1 = arith.addi %0, %arg1 : i32
    %c0_i32 = arith.constant 0 : i32
    %2 = arith.minsi %1, %c0_i32 : i32
    %c0_i32_0 = arith.constant 0 : i32
    %c0_i32_1 = arith.constant 0 : i32
    return %2, %c0_i32_0 : i32, i32
  }
  func.func @transform_2(%arg0: i32, %arg1: i32) -> (i32, i32, i32) {
    %c0_i32 = arith.constant 0 : i32
    %c0_i32_0 = arith.constant 0 : i32
    %c0_i32_1 = arith.constant 0 : i32
    return %arg0, %c0_i32, %c0_i32_0 : i32, i32, i32
  }
}

</mosaic_0001>

<llo_original>
// kernel: tpu_custom_call.1
$region0: #{tpu_custom_call.1}
  #allocation0 [shape = 'u32[]', space=smem, size = 0x4, offset = 0x4, fixed_abs, tag = 'smem constant byte address 0x4 - core index']
  #allocation1 [shape = 'u32[144,128]{1,0:T(1,128)}', space=vmem, size = 0x12000, scoped, tag = 'internal scratch']
  %s0 = inlined_call_operand.hbm [shape: f32[16,128], index: 0, kind: input, shape index: {}]
  %s1 = inlined_call_operand.hbm [shape: f32[16,128], index: 1, kind: input, shape index: {}]
  %s2 = inlined_call_operand.hbm [shape: f32[1,8,128], index: 2, kind: output, shape index: {}]
  %s3 = sld [smem:[#allocation0]]
  $region38: #{tpu_custom_call.1} parent=0
    _
  %s5 = ssub.s32 1, %s3
  %s6 = scalar_select 0, %s5, %s3
  $region1: #{tpu_custom_call.1} parent=0
    #allocation2 [shape = 'u8[8192]{0}', space=vmem, size = 0x2000, scoped, tag = 'input window, operand 0, single buffered']
    #allocation3 [shape = 's32[1]{0}', space=sflag, size = 0x4, scoped, tag = 'scoped memory for tpu_custom_call.1']
    #allocation4 [shape = 's32[1]{0}', space=sflag, size = 0x4, scoped, tag = 'scoped memory for tpu_custom_call.1']
    #allocation5 [shape = 'u8[8192]{0}', space=vmem, size = 0x2000, scoped, tag = 'input window, operand 1, single buffered']
    #allocation6 [shape = 's32[1]{0}', space=sflag, size = 0x4, scoped, tag = 'scoped memory for tpu_custom_call.1']
    #allocation7 [shape = 'u8[4096]{0}', space=vmem, size = 0x1000, scoped, tag = 'output window, operand 0, single buffered']
    %7 = vsyncpa [#allocation3], 0
    %8 = vsyncpa [#allocation6], 0
    %9 = vsyncpa [#allocation4], 0
    // Predicated region
    $region2: #{tpu_custom_call.1} parent=1 // pred_check
      _
    $region3: #{tpu_custom_call.1} parent=1 // pred_check_branch
      %11 = sbr.rel (0) target = $region5
    $region4: #{tpu_custom_call.1} parent=1 // pred_region
      %s12 = sadd.s32 0, 0
      %p13 = scmp.lt.s32.totalorder %s12, 0
      %s14 = scalar_select %p13, %s12, 0
      %s15 = smul.u32 2, %s14
      %s17 = ssub.s32 256, 256
      %18 = vsyncadd [#allocation3], %s17
      %s19 = smul.addr %s15, 128
      %s20 = scalar_lea.hbm %s0, %s19
      %s21 = sshll.u32 [#allocation2], 4
      %s22 = int_to_ptr.vmem [resolvable:$true] %s21
      %27 = dma.hbm_to_vmem [thread:$0]  %s20, 256, %s22, [#allocation3], 128, 128, 8
    $region5: #{tpu_custom_call.1} parent=1 // pred_fallthru
      _
    // Predicated region
    $region6: #{tpu_custom_call.1} parent=1 // pred_check
      _
    $region7: #{tpu_custom_call.1} parent=1 // pred_check_branch
      %29 = sbr.rel (0) target = $region9
    $region8: #{tpu_custom_call.1} parent=1 // pred_region
      %s30 = sadd.s32 0, 0
      %p31 = scmp.lt.s32.totalorder %s30, 0
      %s32 = scalar_select %p31, %s30, 0
      %s33 = smul.u32 2, %s32
      %s35 = ssub.s32 256, 256
      %36 = vsyncadd [#allocation6], %s35
      %s37 = smul.addr %s33, 128
      %s38 = scalar_lea.hbm %s1, %s37
      %s39 = sshll.u32 [#allocation5], 4
      %s40 = int_to_ptr.vmem [resolvable:$true] %s39
      %45 = dma.hbm_to_vmem [thread:$0]  %s38, 256, %s40, [#allocation6], 128, 128, 8
    $region9: #{tpu_custom_call.1} parent=1 // pred_fallthru
      _
    // Predicated region
    $region10: #{tpu_custom_call.1} parent=1 // pred_check
      _
    $region11: #{tpu_custom_call.1} parent=1 // pred_check_branch
      %47 = sbr.rel (0) target = $region13
    $region12: #{tpu_custom_call.1} parent=1 // pred_region
      %48 = dma.done [#allocation3], 256
    $region13: #{tpu_custom_call.1} parent=1 // pred_fallthru
      _
    // Predicated region
    $region14: #{tpu_custom_call.1} parent=1 // pred_check
      _
    $region15: #{tpu_custom_call.1} parent=1 // pred_check_branch
      %50 = sbr.rel (0) target = $region17
    $region16: #{tpu_custom_call.1} parent=1 // pred_region
      %51 = dma.done [#allocation6], 256
    $region17: #{tpu_custom_call.1} parent=1 // pred_fallthru
      _
    %s52 = sadd.s32 0, 0
    %p53 = scmp.lt.s32.totalorder %s52, 0
    %s54 = scalar_select %p53, %s52, 0
    %s55 = smul.u32 2, %s54
    %s56 = sadd.s32 0, 0
    %p57 = scmp.lt.s32.totalorder %s56, 0
    %s58 = scalar_select %p57, %s56, 0
    %s59 = smul.u32 2, %s58
    %p60 = scmp.eq.s32.totalorder 0, 0
    // Predicated region
    $region18: #{tpu_custom_call.1} parent=1 // pred_check
      %p61 = pneg %p60
    $region19: #{tpu_custom_call.1} parent=1 // pred_check_branch
      %63 = sbr.rel (%p61) target = $region21
    $region20: #{tpu_custom_call.1} parent=1 // pred_region
      %64 = vst [vmem:[#allocation7] sm:$0xff] 0.0
    $region21: #{tpu_custom_call.1} parent=1 // pred_fallthru
      _
    %s65 = sadd.s32 0, 0
    %s66 = smul.u32 %s65, 16
    %s67 = ssub.s32 16, %s66
    %p68 = scmp.ge.s32.totalorder %s67, 16
    // Predicated region
    $region22: #{tpu_custom_call.1} parent=1 // pred_check
      %p69 = pneg %p68
    $region23: #{tpu_custom_call.1} parent=1 // pred_check_branch
      %71 = sbr.rel (%p69) target = $region25
    $region24: #{tpu_custom_call.1} parent=1 // pred_region
      %v72 = vld [vmem:[#allocation7] sm:$0xff]
      %v73 = vld [vmem:[#allocation2] sm:$0xff]
      %v74 = vld [vmem:[#allocation2 + $0x8] sm:$0xff]
      %v75 = vld [vmem:[#allocation5] sm:$0xff]
      %v76 = vld [vmem:[#allocation5 + $0x8] sm:$0xff]
      %v77 = vmul.f32 %v75, %v73
      %v78 = vmul.f32 %v76, %v74
      %v79 = vsub.f32 1.0, %v75
      %v80 = vsub.f32 1.0, %v76
      %v81 = vsub.f32 1.0, %v73
      %v82 = vsub.f32 1.0, %v74
      %v83 = vmul.f32 %v79, %v81
      %v84 = vmul.f32 %v80, %v82
      %v85 = vadd.f32 %v77, %v83
      %v86 = vadd.f32 %v78, %v84
      %v87 = vmul.f32 %v75, 1.5
      %v88 = vmul.f32 %v76, 1.5
      %v89 = vadd.f32 %v87, 1.0
      %v90 = vadd.f32 %v88, 1.0
      %v91 = vsub.f32 0.0, %v89
      %v92 = vsub.f32 0.0, %v90
      %v93 = vlog2.pop %v85
      %v94 = vmul.f32 %v93, 0.6931472
      %v95 = vlog2.pop %v86
      %v96 = vmul.f32 %v95, 0.6931472
      %v97 = vmax.f32 %v94, -100.0
      %v98 = vmax.f32 %v96, -100.0
      %v99 = vmul.f32 %v91, %v97
      %v100 = vmul.f32 %v92, %v98
      %v101 = vadd.f32 %v99, %v100
      %v102 = vadd.f32 %v101, 0.0
      %v103 = vadd.f32 %v72, %v102
      %104 = vst [vmem:[#allocation7] sm:$0xff] %v103
    $region25: #{tpu_custom_call.1} parent=1 // pred_fallthru
      _
    %p105 = scmp.lt.s32.totalorder %s67, 16
    // Predicated region
    $region26: #{tpu_custom_call.1} parent=1 // pred_check
      %p106 = pneg %p105
    $region27: #{tpu_custom_call.1} parent=1 // pred_check_branch
      %108 = sbr.rel (%p106) target = $region29
    $region28: #{tpu_custom_call.1} parent=1 // pred_region
      %v109 = vld [vmem:[#allocation7] sm:$0xff]
      %v110 = vld [vmem:[#allocation2] sm:$0xff]
      %v111 = vld [vmem:[#allocation2 + $0x8] sm:$0xff]
      %v112 = vld [vmem:[#allocation5] sm:$0xff]
      %v113 = vld [vmem:[#allocation5 + $0x8] sm:$0xff]
      %v114 = vmul.f32 %v112, %v110
      %v115 = vmul.f32 %v113, %v111
      %v116 = vsub.f32 1.0, %v112
      %v117 = vsub.f32 1.0, %v113
      %v118 = vsub.f32 1.0, %v110
      %v119 = vsub.f32 1.0, %v111
      %v120 = vmul.f32 %v116, %v118
      %v121 = vmul.f32 %v117, %v119
      %v122 = vadd.f32 %v114, %v120
      %v123 = vadd.f32 %v115, %v121
      %v124 = vmul.f32 %v112, 1.5
      %v125 = vmul.f32 %v113, 1.5
      %v126 = vadd.f32 %v124, 1.0
      %v127 = vadd.f32 %v125, 1.0
      %v128 = vsub.f32 0.0, %v126
      %v129 = vsub.f32 0.0, %v127
      %v130 = vlog2.pop %v122
      %v131 = vmul.f32 %v130, 0.6931472
      %v132 = vlog2.pop %v123
      %v133 = vmul.f32 %v132, 0.6931472
      %v134 = vmax.f32 %v131, -100.0
      %v135 = vmax.f32 %v133, -100.0
      %v136 = vmul.f32 %v128, %v134
      %v137 = vmul.f32 %v129, %v135
      %v138 = vlaneseq
      %v139 = vshrl.u32 %v138, 7
      %v140 = vadd.s32 %v139, 8
      %v141 = vstv %s67
      %vm142 = vcmp.lt.s32.totalorder %v139, %v141
      %vm143 = vcmp.lt.s32.totalorder %v140, %v141
      %v144 = vsel %vm142, %v136, 0.0
      %v145 = vsel %vm143, %v137, 0.0
      %v146 = vadd.f32 %v144, %v145
      %v147 = vadd.f32 %v146, 0.0
      %v148 = vadd.f32 %v109, %v147
      %149 = vst [vmem:[#allocation7] sm:$0xff] %v148
    $region29: #{tpu_custom_call.1} parent=1 // pred_fallthru
      _
    // Predicated region
    $region30: #{tpu_custom_call.1} parent=1 // pred_check
      _
    $region31: #{tpu_custom_call.1} parent=1 // pred_check_branch
      %151 = sbr.rel (0) target = $region33
    $region32: #{tpu_custom_call.1} parent=1 // pred_region
      %s153 = ssub.s32 128, 128
      %154 = vsyncadd [#allocation4], %s153
      %s156 = sshll.u32 [#allocation7], 4
      %s157 = int_to_ptr.vmem [resolvable:$true] %s156
      %159 = dma.vmem_to_hbm [thread:$0]  %s157, 128, %s2, [#allocation4]
    $region33: #{tpu_custom_call.1} parent=1 // pred_fallthru
      _
    // Predicated region
    $region34: #{tpu_custom_call.1} parent=1 // pred_check
      _
    $region35: #{tpu_custom_call.1} parent=1 // pred_check_branch
      %161 = sbr.rel (0) target = $region37
    $region36: #{tpu_custom_call.1} parent=1 // pred_region
      %162 = dma.done [#allocation4], 128
    $region37: #{tpu_custom_call.1} parent=1 // pred_fallthru
      _
    %163 = vsyncpa [#allocation3], 1
    %164 = vsyncpa [#allocation6], 1
    %165 = vsyncpa [#allocation4], 1

</llo_original>
